<compile_context>
chip_gen: v7x
topology: tpu7x:2x2x1
jax: 0.10.0
libtpu: 0.0.40
codegen_flags: <defaults>
</compile_context>

<pallas_src>
import functools

import jax
import jax.numpy as jnp
from jax.experimental import pallas as pl
from jax.experimental.pallas import tpu as pltpu


def _round_up(x, m):
    return ((x + m - 1) // m) * m


def siam_kernel(x_ref, w1_ref, b1_ref, w2_ref, b2_ref, w3_ref, b3_ref, d_ref,
                *, h4, matmul_dtype):
    """One batch tile of the siamese forward.

    Weights are block-diagonal packed in the wrapper (W' = blockdiag(w, w),
    b' = [b, b]), so the shared MLP for BOTH branches is three plain matmuls on
    the raw (tile_b, 2V) X block: columns [:V] carry branch 1, [V:] branch 2.
    """

    def dot(a, w_ref):
        # LHS cast is lane-local in VMEM (no HBM traffic); accumulation in f32.
        return jnp.dot(a.astype(matmul_dtype), w_ref[...],
                       preferred_element_type=jnp.float32)

    def leaky_relu(h):                    # element-wise math stays f32 (v5e-safe)
        return jnp.where(h > 0, h, 0.01 * h)

    h = leaky_relu(dot(x_ref[...], w1_ref) + b1_ref[...])      # (tb, 2H)
    # TODO(synk): nn.Dropout(p=0.01) is identity at inference; training-mode
    #             masking (pltpu.prng_seed / prng_random_bits) not implemented.
    h = leaky_relu(dot(h, w2_ref) + b2_ref[...])                # (tb, 2*H2)
    y = dot(h, w3_ref) + b3_ref[...]                            # (tb, 2*H4)

    # pairwise_distance with the batch on the lane axis: transpose once, diff
    # sublane rows 0:H4 vs H4:2*H4, reduce over sublanes, store a lane-dense
    # unmasked (1, tile_b) block (tile_b is a multiple of 128).
    yt = y.T                                                    # (2*H4, tb)
    diff = yt[:h4, :] - yt[h4:, :] + 1e-6     # eps matches torch F.pairwise_distance
    d_ref[...] = jnp.sqrt(jnp.sum(diff * diff, axis=0, keepdims=True))   # (1, tb)


def _block_diag(w):
    fi, fo = w.shape
    z = jnp.zeros((fi, fo), w.dtype)
    top = jnp.concatenate([w, z], axis=1)
    bot = jnp.concatenate([z, w], axis=1)
    return jnp.concatenate([top, bot], axis=0)


def siam_forward(X, params, *, tile_b=None, use_bf16_matmul=True,
                 core_parallel=False, x_buffers=None):
    """Returns (pairwise_distance [B], 0) -- same contract as Siam_Model.forward."""
    w1, b1, w2, b2, w3, b3 = params
    B, two_v = X.shape
    V = two_v // 2
    H, H2, H4 = w1.shape[1], w2.shape[1], w3.shape[1]

    # Tile selection: large (amortize ~0.35 us per grid step), multiple of 128
    # (unmasked lane-dense stores), but never much larger than the batch.
    if tile_b is None:
        tile_b = min(_round_up(B, 128), 4096)
    tile_b = max(128, _round_up(tile_b, 128))
    n_tiles = pl.cdiv(B, tile_b)
    B_pad = n_tiles * tile_b
    if B_pad != B:
        X = jnp.pad(X, ((0, B_pad - B), (0, 0)))

    # Block-diagonal packed parameters (built once, tiny vs. the X stream).
    W1, W2, W3 = _block_diag(w1), _block_diag(w2), _block_diag(w3)
    B1 = jnp.concatenate([b1, b1], axis=1)
    B2 = jnp.concatenate([b2, b2], axis=1)
    B3 = jnp.concatenate([b3, b3], axis=1)

    matmul_dtype = jnp.float32
    if use_bf16_matmul:
        # Cast ONLY the tiny packed weights here; X is not cast in the wrapper
        # (that would be an extra full HBM read+write).  If the producer already
        # emits bf16 X, the dominant HBM stream is halved for free.
        matmul_dtype = jnp.bfloat16
        W1, W2, W3 = (w.astype(jnp.bfloat16) for w in (W1, W2, W3))

    kernel = functools.partial(siam_kernel, h4=H4, matmul_dtype=matmul_dtype)
    const = lambda i: (0, 0)

    x_spec_kwargs = {}
    if x_buffers is not None and x_buffers != 2:
        # Deepen the X input pipeline if profiling still shows exposed DMA.
        x_spec_kwargs["pipeline_mode"] = pl.Buffered(x_buffers)

    # Explicit VMEM budget: double-buffered X tiles + resident packed weights +
    # the f32 activation chain (keeps big tiles legal under v5e's 16 MiB scoped
    # default; capped at v7x's 64 MiB physical VMEM).
    w_bytes = sum(a.size * a.dtype.itemsize for a in (W1, B1, W2, B2, W3, B3))
    vmem_est = (2 * tile_b * 2 * V * X.dtype.itemsize
                + 2 * w_bytes
                + tile_b * (2 * H + 2 * H2 + 4 * H4) * 4
                + 2 * tile_b * 4)
    vmem_limit = int(min(64 << 20, max(32 << 20, 2 * vmem_est)))

    # "parallel" for v5e/v6e; CORE_PARALLEL shards the batch grid across v7x's
    # two TensorCores (~2x there, also halves per-core HBM demand).
    dim_sem = (pltpu.CORE_PARALLEL,) if core_parallel else ("parallel",)

    flops = 2 * B_pad * (W1.size + W2.size + W3.size)
    bytes_accessed = X.size * X.dtype.itemsize + w_bytes + B_pad * 4

    d = pl.pallas_call(
        kernel,
        out_shape=jax.ShapeDtypeStruct((1, B_pad), jnp.float32),
        grid=(n_tiles,),
        in_specs=[
            pl.BlockSpec((tile_b, 2 * V), lambda i: (i, 0), **x_spec_kwargs),
            pl.BlockSpec((2 * V, 2 * H), const),    # packed weights / biases:
            pl.BlockSpec((1, 2 * H), const),        # VMEM-resident (constant map)
            pl.BlockSpec((2 * H, 2 * H2), const),
            pl.BlockSpec((1, 2 * H2), const),
            pl.BlockSpec((2 * H2, 2 * H4), const),
            pl.BlockSpec((1, 2 * H4), const),
        ],
        out_specs=pl.BlockSpec((1, tile_b), lambda i: (0, i)),
        compiler_params=pltpu.CompilerParams(
            dimension_semantics=dim_sem,
            vmem_limit_bytes=vmem_limit),
        cost_estimate=pl.CostEstimate(flops=flops, transcendentals=B_pad,
                                      bytes_accessed=bytes_accessed),
    )(X, W1, B1, W2, B2, W3, B3)

    return d.reshape(B_pad)[:B], 0


def init_params(key, vec_size, hidden_size):
    """Deterministic init; weights stored as [in, out], biases as [1, out]."""
    h2 = hidden_size // 2
    h4 = hidden_size // 4
    ks = jax.random.split(key, 6)

    def lin(kw, kb, fan_in, fan_out):
        bound = 1.0 / jnp.sqrt(jnp.float32(fan_in))   # torch.nn.Linear-style init
        w = jax.random.uniform(kw, (fan_in, fan_out), jnp.float32, -bound, bound)
        b = jax.random.uniform(kb, (1, fan_out), jnp.float32, -bound, bound)
        return w, b

    w1, b1 = lin(ks[0], ks[1], vec_size, hidden_size)
    w2, b2 = lin(ks[2], ks[3], hidden_size, h2)
    w3, b3 = lin(ks[4], ks[5], h2, h4)
    return (w1, b1, w2, b2, w3, b3)


def ref_forward(X, params):
    """Pure-JAX reference (same math as Siam_Model.forward, no Pallas)."""
    w1, b1, w2, b2, w3, b3 = params
    V = X.shape[1] // 2
    x1, x2 = X[:, :V], X[:, V:]

    def mlp(x):
        h = x @ w1 + b1
        h = jnp.where(h > 0, h, 0.01 * h)
        h = h @ w2 + b2
        h = jnp.where(h > 0, h, 0.01 * h)
        return h @ w3 + b3

    d = mlp(x1) - mlp(x2) + 1e-6
    return jnp.sqrt(jnp.sum(d * d, axis=-1))


if __name__ == "__main__":
    VEC, HID = 32, 32            # MLP: 32 -> 32 -> 16 -> 8
    key = jax.random.PRNGKey(0)
    k_x, k_x2, k_p = jax.random.split(key, 3)
    params = init_params(k_p, VEC, HID)

    # 1) small batch, f32 matmuls (strict correctness; single 128-row tile + pad)
    B = 8
    X = jax.random.normal(k_x, (B, 2 * VEC), dtype=jnp.float32)
    D, zero = siam_forward(X, params, use_bf16_matmul=False)
    D = jax.block_until_ready(D)
    assert D.shape == (B,) and zero == 0
    assert jnp.allclose(D, ref_forward(X, params), rtol=1e-5, atol=1e-5)

    # 2) multi-tile run exercising the batch grid + padding, f32
    B2 = 272
    X2 = jax.random.normal(k_x2, (B2, 2 * VEC), dtype=jnp.float32)
    D2, _ = siam_forward(X2, params, tile_b=128, use_bf16_matmul=False)
    D2 = jax.block_until_ready(D2)
    assert D2.shape == (B2,)
    assert jnp.allclose(D2, ref_forward(X2, params), rtol=1e-4, atol=1e-4)

    # 3) default path: bf16 matmul operands + large auto tile; tolerance-checked
    #    against the f32 reference (review request, not just isfinite).
    D3, _ = siam_forward(X2, params)
    D3 = jax.block_until_ready(D3)
    assert D3.shape == (B2,)
    assert jnp.allclose(D3, ref_forward(X2, params), rtol=5e-2, atol=5e-2)

    # 4) producer-side bf16 X (no wrapper-side cast): dominant HBM stream halved.
    X2b = X2.astype(jnp.bfloat16)
    D4, _ = siam_forward(X2b, params)
    D4 = jax.block_until_ready(D4)
    assert D4.shape == (B2,)
    assert jnp.allclose(D4, ref_forward(X2, params), rtol=5e-2, atol=5e-2)

    print("KERNEL_OK")
</pallas_src>

<mosaic_0001>
module attributes {stable_mosaic.version = 11 : i64} {
  func.func @siam_kernel(%arg0: i32, %arg1: memref<128x64xf32, #tpu.memory_space<vmem>>, %arg2: memref<64x64xf32, #tpu.memory_space<vmem>>, %arg3: memref<1x64xf32, #tpu.memory_space<vmem>>, %arg4: memref<64x32xf32, #tpu.memory_space<vmem>>, %arg5: memref<1x32xf32, #tpu.memory_space<vmem>>, %arg6: memref<32x16xf32, #tpu.memory_space<vmem>>, %arg7: memref<1x16xf32, #tpu.memory_space<vmem>>, %arg8: memref<1x128xf32, #tpu.memory_space<vmem>>) attributes {dimension_semantics = [#tpu.dimension_semantics<parallel>], iteration_bounds = array<i64: 1>, scalar_prefetch = 0 : i64, scratch_operands = 0 : i64, tpu.core_type = #tpu.core_type<tc>, window_params = [{transform_indices = @transform_0, window_bounds = array<i64: 128, 64>}, {pipeline_mode = #tpu.pipeline_mode<synchronous>, transform_indices = @transform_1, window_bounds = array<i64: 64, 64>}, {pipeline_mode = #tpu.pipeline_mode<synchronous>, transform_indices = @transform_2, window_bounds = array<i64: 1, 64>}, {pipeline_mode = #tpu.pipeline_mode<synchronous>, transform_indices = @transform_3, window_bounds = array<i64: 64, 32>}, {pipeline_mode = #tpu.pipeline_mode<synchronous>, transform_indices = @transform_4, window_bounds = array<i64: 1, 32>}, {pipeline_mode = #tpu.pipeline_mode<synchronous>, transform_indices = @transform_5, window_bounds = array<i64: 32, 16>}, {pipeline_mode = #tpu.pipeline_mode<synchronous>, transform_indices = @transform_6, window_bounds = array<i64: 1, 16>}, {transform_indices = @transform_7, window_bounds = array<i64: 1, 128>}]} {
    %c0 = arith.constant 0 : index
    %c0_0 = arith.constant 0 : index
    %0 = vector.load %arg1[%c0, %c0_0] : memref<128x64xf32, #tpu.memory_space<vmem>>, vector<128x64xf32>
    %c0_1 = arith.constant 0 : index
    %c0_2 = arith.constant 0 : index
    %1 = vector.load %arg2[%c0_1, %c0_2] : memref<64x64xf32, #tpu.memory_space<vmem>>, vector<64x64xf32>
    %cst = arith.constant dense<0.000000e+00> : vector<128x64xf32>
    %2 = tpu.matmul %0, %1, %cst {dimension_numbers = #tpu.dot_dimension_numbers<[1], [0], [0], [1], [0, 0, 1, 1], [], []>} : vector<128x64xf32>, vector<64x64xf32>, vector<128x64xf32> -> vector<128x64xf32>
    %c0_3 = arith.constant 0 : index
    %c0_4 = arith.constant 0 : index
    %3 = vector.load %arg3[%c0_3, %c0_4] : memref<1x64xf32, #tpu.memory_space<vmem>>, vector<1x64xf32>
    %4 = vector.broadcast %3 : vector<1x64xf32> to vector<128x64xf32>
    %5 = arith.addf %2, %4 : vector<128x64xf32>
    %cst_5 = arith.constant 0.000000e+00 : f32
    %6 = vector.broadcast %cst_5 : f32 to vector<128x64xf32>
    %7 = arith.cmpf ogt, %5, %6 : vector<128x64xf32>
    %cst_6 = arith.constant 0.00999999977 : f32
    %8 = vector.broadcast %cst_6 : f32 to vector<128x64xf32>
    %9 = arith.mulf %8, %5 : vector<128x64xf32>
    %10 = arith.select %7, %5, %9 : vector<128x64xi1>, vector<128x64xf32>
    %c0_7 = arith.constant 0 : index
    %c0_8 = arith.constant 0 : index
    %11 = vector.load %arg4[%c0_7, %c0_8] : memref<64x32xf32, #tpu.memory_space<vmem>>, vector<64x32xf32>
    %cst_9 = arith.constant dense<0.000000e+00> : vector<128x32xf32>
    %12 = tpu.matmul %10, %11, %cst_9 {dimension_numbers = #tpu.dot_dimension_numbers<[1], [0], [0], [1], [0, 0, 1, 1], [], []>} : vector<128x64xf32>, vector<64x32xf32>, vector<128x32xf32> -> vector<128x32xf32>
    %c0_10 = arith.constant 0 : index
    %c0_11 = arith.constant 0 : index
    %13 = vector.load %arg5[%c0_10, %c0_11] : memref<1x32xf32, #tpu.memory_space<vmem>>, vector<1x32xf32>
    %14 = vector.broadcast %13 : vector<1x32xf32> to vector<128x32xf32>
    %15 = arith.addf %12, %14 : vector<128x32xf32>
    %cst_12 = arith.constant 0.000000e+00 : f32
    %16 = vector.broadcast %cst_12 : f32 to vector<128x32xf32>
    %17 = arith.cmpf ogt, %15, %16 : vector<128x32xf32>
    %cst_13 = arith.constant 0.00999999977 : f32
    %18 = vector.broadcast %cst_13 : f32 to vector<128x32xf32>
    %19 = arith.mulf %18, %15 : vector<128x32xf32>
    %20 = arith.select %17, %15, %19 : vector<128x32xi1>, vector<128x32xf32>
    %c0_14 = arith.constant 0 : index
    %c0_15 = arith.constant 0 : index
    %21 = vector.load %arg6[%c0_14, %c0_15] : memref<32x16xf32, #tpu.memory_space<vmem>>, vector<32x16xf32>
    %cst_16 = arith.constant dense<0.000000e+00> : vector<128x16xf32>
    %22 = tpu.matmul %20, %21, %cst_16 {dimension_numbers = #tpu.dot_dimension_numbers<[1], [0], [0], [1], [0, 0, 1, 1], [], []>} : vector<128x32xf32>, vector<32x16xf32>, vector<128x16xf32> -> vector<128x16xf32>
    %c0_17 = arith.constant 0 : index
    %c0_18 = arith.constant 0 : index
    %23 = vector.load %arg7[%c0_17, %c0_18] : memref<1x16xf32, #tpu.memory_space<vmem>>, vector<1x16xf32>
    %24 = vector.broadcast %23 : vector<1x16xf32> to vector<128x16xf32>
    %25 = arith.addf %22, %24 : vector<128x16xf32>
    %26 = tpu.transpose %25, [1, 0] : vector<128x16xf32> -> vector<16x128xf32>
    %27 = vector.extract_strided_slice %26 {offsets = [0, 0], sizes = [8, 128], strides = [1, 1]} : vector<16x128xf32> to vector<8x128xf32>
    %28 = vector.extract_strided_slice %26 {offsets = [8, 0], sizes = [8, 128], strides = [1, 1]} : vector<16x128xf32> to vector<8x128xf32>
    %29 = arith.subf %27, %28 : vector<8x128xf32>
    %cst_19 = arith.constant 9.99999997E-7 : f32
    %30 = vector.broadcast %cst_19 : f32 to vector<8x128xf32>
    %31 = arith.addf %29, %30 : vector<8x128xf32>
    %32 = arith.mulf %31, %31 : vector<8x128xf32>
    %cst_20 = arith.constant dense<0.000000e+00> : vector<128xf32>
    %33 = vector.multi_reduction <add>, %32, %cst_20 [0] : vector<8x128xf32> to vector<128xf32>
    %34 = vector.shape_cast %33 : vector<128xf32> to vector<1x128xf32>
    %35 = math.sqrt %34 : vector<1x128xf32>
    %c0_21 = arith.constant 0 : index
    %c0_22 = arith.constant 0 : index
    %36 = vector.load %arg8[%c0_21, %c0_22] : memref<1x128xf32, #tpu.memory_space<vmem>>, vector<1x128xf32>
    tpu.vector_store %arg8[%c0_21, %c0_22], %35 {strides = array<i32>} : memref<1x128xf32, #tpu.memory_space<vmem>>, vector<1x128xf32>,
    return
  }
  func.func @transform_0(%arg0: i32) -> (i32, i32) {
    %c0_i32 = arith.constant 0 : i32
    %c0_i32_0 = arith.constant 0 : i32
    return %arg0, %c0_i32 : i32, i32
  }
  func.func @transform_1(%arg0: i32) -> (i32, i32) {
    %c0_i32 = arith.constant 0 : i32
    %c0_i32_0 = arith.constant 0 : i32
    %c0_i32_1 = arith.constant 0 : i32
    return %c0_i32, %c0_i32_0 : i32, i32
  }
  func.func @transform_2(%arg0: i32) -> (i32, i32) {
    %c0_i32 = arith.constant 0 : i32
    %c0_i32_0 = arith.constant 0 : i32
    %c0_i32_1 = arith.constant 0 : i32
    return %c0_i32, %c0_i32_0 : i32, i32
  }
  func.func @transform_3(%arg0: i32) -> (i32, i32) {
    %c0_i32 = arith.constant 0 : i32
    %c0_i32_0 = arith.constant 0 : i32
    %c0_i32_1 = arith.constant 0 : i32
    return %c0_i32, %c0_i32_0 : i32, i32
  }
  func.func @transform_4(%arg0: i32) -> (i32, i32) {
    %c0_i32 = arith.constant 0 : i32
    %c0_i32_0 = arith.constant 0 : i32
    %c0_i32_1 = arith.constant 0 : i32
    return %c0_i32, %c0_i32_0 : i32, i32
  }
  func.func @transform_5(%arg0: i32) -> (i32, i32) {
    %c0_i32 = arith.constant 0 : i32
    %c0_i32_0 = arith.constant 0 : i32
    %c0_i32_1 = arith.constant 0 : i32
    return %c0_i32, %c0_i32_0 : i32, i32
  }
  func.func @transform_6(%arg0: i32) -> (i32, i32) {
    %c0_i32 = arith.constant 0 : i32
    %c0_i32_0 = arith.constant 0 : i32
    %c0_i32_1 = arith.constant 0 : i32
    return %c0_i32, %c0_i32_0 : i32, i32
  }
  func.func @transform_7(%arg0: i32) -> (i32, i32) {
    %c0_i32 = arith.constant 0 : i32
    %c0_i32_0 = arith.constant 0 : i32
    return %c0_i32, %arg0 : i32, i32
  }
}

</mosaic_0001>

<llo_original>
// kernel: tpu_custom_call.1
$region0: #{tpu_custom_call.1}
  #allocation0 [shape = 'u32[]', space=smem, size = 0x4, offset = 0x4, fixed_abs, tag = 'smem constant byte address 0x4 - core index']
  #allocation1 [shape = 'u32[144,128]{1,0:T(1,128)}', space=vmem, size = 0x12000, scoped, tag = 'internal scratch']
  %s0 = inlined_call_operand.vmem [shape: f32[128,64], index: 0, kind: input, shape index: {}]
  %s1 = inlined_call_operand.vmem [shape: f32[64,64], index: 1, kind: input, shape index: {}]
  %s2 = inlined_call_operand.vmem [shape: f32[1,64], index: 2, kind: input, shape index: {}]
  %s3 = inlined_call_operand.vmem [shape: f32[64,32], index: 3, kind: input, shape index: {}]
  %s4 = inlined_call_operand.vmem [shape: f32[1,32], index: 4, kind: input, shape index: {}]
  %s5 = inlined_call_operand.vmem [shape: f32[32,16], index: 5, kind: input, shape index: {}]
  %s6 = inlined_call_operand.vmem [shape: f32[1,16], index: 6, kind: input, shape index: {}]
  %s7 = inlined_call_operand.hbm [shape: f32[1,128], index: 7, kind: output, shape index: {}]
  %s8 = sld [smem:[#allocation0]]
  $region38: #{tpu_custom_call.1} parent=0
    _
  %s10 = ssub.s32 1, %s8
  %s11 = scalar_select 0, %s10, %s8
  $region1: #{tpu_custom_call.1} parent=0
    #allocation2 [shape = 'u8[512]{0}', space=vmem, size = 0x400, scoped, tag = 'output window, operand 0, single buffered']
    #allocation3 [shape = 's32[1]{0}', space=sflag, size = 0x4, scoped, tag = 'scoped memory for tpu_custom_call.1']
    %12 = vsyncpa [#allocation3], 0
    // Predicated region
    $region2: #{tpu_custom_call.1} parent=1 // pred_check
      _
    $region3: #{tpu_custom_call.1} parent=1 // pred_check_branch
      %14 = sbr.rel (0) target = $region5
    $region4: #{tpu_custom_call.1} parent=1 // pred_region
      _
    $region5: #{tpu_custom_call.1} parent=1 // pred_fallthru
      _
    // Predicated region
    $region6: #{tpu_custom_call.1} parent=1 // pred_check
      _
    $region7: #{tpu_custom_call.1} parent=1 // pred_check_branch
      %16 = sbr.rel (0) target = $region9
    $region8: #{tpu_custom_call.1} parent=1 // pred_region
      _
    $region9: #{tpu_custom_call.1} parent=1 // pred_fallthru
      _
    // Predicated region
    $region10: #{tpu_custom_call.1} parent=1 // pred_check
      _
    $region11: #{tpu_custom_call.1} parent=1 // pred_check_branch
      %18 = sbr.rel (0) target = $region13
    $region12: #{tpu_custom_call.1} parent=1 // pred_region
      _
    $region13: #{tpu_custom_call.1} parent=1 // pred_fallthru
      _
    // Predicated region
    $region14: #{tpu_custom_call.1} parent=1 // pred_check
      _
    $region15: #{tpu_custom_call.1} parent=1 // pred_check_branch
      %20 = sbr.rel (0) target = $region17
    $region16: #{tpu_custom_call.1} parent=1 // pred_region
      _
    $region17: #{tpu_custom_call.1} parent=1 // pred_fallthru
      _
    // Predicated region
    $region18: #{tpu_custom_call.1} parent=1 // pred_check
      _
    $region19: #{tpu_custom_call.1} parent=1 // pred_check_branch
      %22 = sbr.rel (0) target = $region21
    $region20: #{tpu_custom_call.1} parent=1 // pred_region
      _
    $region21: #{tpu_custom_call.1} parent=1 // pred_fallthru
      _
    // Predicated region
    $region22: #{tpu_custom_call.1} parent=1 // pred_check
      _
    $region23: #{tpu_custom_call.1} parent=1 // pred_check_branch
      %24 = sbr.rel (0) target = $region25
    $region24: #{tpu_custom_call.1} parent=1 // pred_region
      _
    $region25: #{tpu_custom_call.1} parent=1 // pred_fallthru
      _
    // Predicated region
    $region26: #{tpu_custom_call.1} parent=1 // pred_check
      _
    $region27: #{tpu_custom_call.1} parent=1 // pred_check_branch
      %26 = sbr.rel (0) target = $region29
    $region28: #{tpu_custom_call.1} parent=1 // pred_region
      _
    $region29: #{tpu_custom_call.1} parent=1 // pred_fallthru
      _
    %v27 = vld [vmem:[%s0] sm:$0xff]
    %v28 = vld [vmem:[%s0 + $0x8] sm:$0xff]
    %v29 = vld [vmem:[%s0 + $0x10] sm:$0xff]
    %v30 = vld [vmem:[%s0 + $0x18] sm:$0xff]
    %v31 = vld [vmem:[%s0 + $0x20] sm:$0xff]
    %v32 = vld [vmem:[%s0 + $0x28] sm:$0xff]
    %v33 = vld [vmem:[%s0 + $0x30] sm:$0xff]
    %v34 = vld [vmem:[%s0 + $0x38] sm:$0xff]
    %v35 = vld [vmem:[%s0 + $0x40] sm:$0xff]
    %v36 = vld [vmem:[%s0 + $0x48] sm:$0xff]
    %v37 = vld [vmem:[%s0 + $0x50] sm:$0xff]
    %v38 = vld [vmem:[%s0 + $0x58] sm:$0xff]
    %v39 = vld [vmem:[%s0 + $0x60] sm:$0xff]
    %v40 = vld [vmem:[%s0 + $0x68] sm:$0xff]
    %v41 = vld [vmem:[%s0 + $0x70] sm:$0xff]
    %v42 = vld [vmem:[%s0 + $0x78] sm:$0xff]
    %v43 = vld [vmem:[%s1] sm:$0xff]
    %v44 = vld [vmem:[%s1 + $0x8] sm:$0xff]
    %v45 = vld [vmem:[%s1 + $0x10] sm:$0xff]
    %v46 = vld [vmem:[%s1 + $0x18] sm:$0xff]
    %v47 = vld [vmem:[%s1 + $0x20] sm:$0xff]
    %v48 = vld [vmem:[%s1 + $0x28] sm:$0xff]
    %v49 = vld [vmem:[%s1 + $0x30] sm:$0xff]
    %v50 = vld [vmem:[%s1 + $0x38] sm:$0xff]
    %v51 = vld [vmem:[%s2] sm:$0x1]
    %v53 = vlaneseq
    %v54 = vshrl.u32 %v53, 7
    %v55 = vsub.s32 0, %v54
    %v56 = vrot.slane %v51, %v55
    %vm58 = vcmask 523264
    %v60 = vsel %vm58, %v27, 0
    %v63 = vsel %vm58, %v28, 0
    %v66 = vsel %vm58, %v29, 0
    %v69 = vsel %vm58, %v30, 0
    %v72 = vsel %vm58, %v31, 0
    %v75 = vsel %vm58, %v32, 0
    %v78 = vsel %vm58, %v33, 0
    %v81 = vsel %vm58, %v34, 0
    %v84 = vsel %vm58, %v35, 0
    %v87 = vsel %vm58, %v36, 0
    %v90 = vsel %vm58, %v37, 0
    %v93 = vsel %vm58, %v38, 0
    %v96 = vsel %vm58, %v39, 0
    %v99 = vsel %vm58, %v40, 0
    %v102 = vsel %vm58, %v41, 0
    %v105 = vsel %vm58, %v42, 0
    %107 = vmatprep.subr.mxu0 0.0
    %108 = vmatpush1.msra.mxu0 %v43
    %109 = vmatprep.subr.mxu0 0.0
    %110 = vmatpush1.msra.mxu0 %v44
    %111 = vmatprep.subr.mxu0 0.0
    %112 = vmatpush1.msra.mxu0 %v45
    %113 = vmatprep.subr.mxu0 0.0
    %114 = vmatpush1.msra.mxu0 %v46
    %115 = vmatprep.subr.mxu0 0.0
    %116 = vmatpush1.msra.mxu0 %v47
    %117 = vmatprep.subr.mxu0 0.0
    %118 = vmatpush1.msra.mxu0 %v48
    %119 = vmatprep.subr.mxu0 0.0
    %120 = vmatpush1.msra.mxu0 %v49
    %121 = vmatprep.subr.mxu0 0.0
    %122 = vmatpush1.msra.mxu0 %v50
    %123 = vmatprep.subr.mxu0 0.0
    %124 = vmatpush1.msra.mxu0 0.0
    %125 = vmatprep.subr.mxu0 0.0
    %126 = vmatpush1.msra.mxu0 0.0
    %127 = vmatprep.subr.mxu0 0.0
    %128 = vmatpush1.msra.mxu0 0.0
    %129 = vmatprep.subr.mxu0 0.0
    %130 = vmatpush1.msra.mxu0 0.0
    %131 = vmatprep.subr.mxu0 0.0
    %132 = vmatpush1.msra.mxu0 0.0
    %133 = vmatprep.subr.mxu0 0.0
    %134 = vmatpush1.msra.mxu0 0.0
    %135 = vmatprep.subr.mxu0 0.0
    %136 = vmatpush1.msra.mxu0 0.0
    %137 = vmatprep.subr.mxu0 0.0
    %138 = vmatpush1.msra.mxu0 0.0
    %139 = vmatprep.subr.mxu0 0.0
    %140 = vmatpush1.msra.mxu0 0.0
    %141 = vmatprep.subr.mxu0 0.0
    %142 = vmatpush1.msra.mxu0 0.0
    %143 = vmatprep.subr.mxu0 0.0
    %144 = vmatpush1.msra.mxu0 0.0
    %145 = vmatprep.subr.mxu0 0.0
    %146 = vmatpush1.msra.mxu0 0.0
    %147 = vmatprep.subr.mxu0 0.0
    %148 = vmatpush1.msra.mxu0 0.0
    %149 = vmatprep.subr.mxu0 0.0
    %150 = vmatpush1.msra.mxu0 0.0
    %151 = vmatprep.subr.mxu0 0.0
    %152 = vmatpush1.msra.mxu0 0.0
    %153 = vmatprep.subr.mxu0 0.0
    %154 = vmatpush1.msra.mxu0 0.0
    %155 = vmatprep.subr.mxu0 0.0
    %156 = vmatpush1.msra.mxu0 0.0
    %157 = vmatprep.subr.mxu0 0.0
    %158 = vmatpush1.msra.mxu0 0.0
    %159 = vmatprep.subr.mxu0 0.0
    %160 = vmatpush1.msra.mxu0 0.0
    %161 = vmatprep.subr.mxu0 0.0
    %162 = vmatpush1.msra.mxu0 0.0
    %163 = vmatprep.subr.mxu0 0.0
    %164 = vmatpush1.msra.mxu0 0.0
    %165 = vmatprep.subr.mxu0 0.0
    %166 = vmatpush1.msra.mxu0 0.0
    %167 = vmatprep.subr.mxu0 0.0
    %168 = vmatpush1.msra.mxu0 0.0
    %169 = vmatprep.subr.mxu0 0.0
    %170 = vmatpush1.msra.mxu0 0.0
    %171 = vmatprep.mubr.f32.mxu0 0.0
    %172 = vmatmul.mubr.f32.gmra.mrb[0].mxu0 %v60
    %v173 = vpop.f32.mrb[0].mxu0
    %v174 = vadd.f32 %v56, %v173
    %v175 = vpop.f32.mrb[0].mxu0
    %176 = vmatprep.mubr.f32.mxu0 0.0
    %177 = vmatmul.mubr.f32.gmra.mrb[0].mxu0 %v63
    %v178 = vpop.f32.mrb[0].mxu0
    %v179 = vadd.f32 %v56, %v178
    %v180 = vpop.f32.mrb[0].mxu0
    %181 = vmatprep.mubr.f32.mxu0 0.0
    %182 = vmatmul.mubr.f32.gmra.mrb[0].mxu0 %v66
    %v183 = vpop.f32.mrb[0].mxu0
    %v184 = vadd.f32 %v56, %v183
    %v185 = vpop.f32.mrb[0].mxu0
    %186 = vmatprep.mubr.f32.mxu0 0.0
    %187 = vmatmul.mubr.f32.gmra.mrb[0].mxu0 %v69
    %v188 = vpop.f32.mrb[0].mxu0
    %v189 = vadd.f32 %v56, %v188
    %v190 = vpop.f32.mrb[0].mxu0
    %191 = vmatprep.mubr.f32.mxu0 0.0
    %192 = vmatmul.mubr.f32.gmra.mrb[0].mxu0 %v72
    %v193 = vpop.f32.mrb[0].mxu0
    %v194 = vadd.f32 %v56, %v193
    %v195 = vpop.f32.mrb[0].mxu0
    %196 = vmatprep.mubr.f32.mxu0 0.0
    %197 = vmatmul.mubr.f32.gmra.mrb[0].mxu0 %v75
    %v198 = vpop.f32.mrb[0].mxu0
    %v199 = vadd.f32 %v56, %v198
    %v200 = vpop.f32.mrb[0].mxu0
    %201 = vmatprep.mubr.f32.mxu0 0.0
    %202 = vmatmul.mubr.f32.gmra.mrb[0].mxu0 %v78
    %v203 = vpop.f32.mrb[0].mxu0
    %v204 = vadd.f32 %v56, %v203
    %v205 = vpop.f32.mrb[0].mxu0
    %206 = vmatprep.mubr.f32.mxu0 0.0
    %207 = vmatmul.mubr.f32.gmra.mrb[0].mxu0 %v81
    %v208 = vpop.f32.mrb[0].mxu0
    %v209 = vadd.f32 %v56, %v208
    %v210 = vpop.f32.mrb[0].mxu0
    %211 = vmatprep.mubr.f32.mxu0 0.0
    %212 = vmatmul.mubr.f32.gmra.mrb[0].mxu0 %v84
    %v213 = vpop.f32.mrb[0].mxu0
    %v214 = vadd.f32 %v56, %v213
    %v215 = vpop.f32.mrb[0].mxu0
    %216 = vmatprep.mubr.f32.mxu0 0.0
    %217 = vmatmul.mubr.f32.gmra.mrb[0].mxu0 %v87
    %v218 = vpop.f32.mrb[0].mxu0
    %v219 = vadd.f32 %v56, %v218
    %v220 = vpop.f32.mrb[0].mxu0
    %221 = vmatprep.mubr.f32.mxu0 0.0
    %222 = vmatmul.mubr.f32.gmra.mrb[0].mxu0 %v90
    %v223 = vpop.f32.mrb[0].mxu0
    %v224 = vadd.f32 %v56, %v223
    %v225 = vpop.f32.mrb[0].mxu0
    %226 = vmatprep.mubr.f32.mxu0 0.0
    %227 = vmatmul.mubr.f32.gmra.mrb[0].mxu0 %v93
    %v228 = vpop.f32.mrb[0].mxu0
    %v229 = vadd.f32 %v56, %v228
    %v230 = vpop.f32.mrb[0].mxu0
    %231 = vmatprep.mubr.f32.mxu0 0.0
    %232 = vmatmul.mubr.f32.gmra.mrb[0].mxu0 %v96
    %v233 = vpop.f32.mrb[0].mxu0
    %v234 = vadd.f32 %v56, %v233
    %v235 = vpop.f32.mrb[0].mxu0
    %236 = vmatprep.mubr.f32.mxu0 0.0
    %237 = vmatmul.mubr.f32.gmra.mrb[0].mxu0 %v99
    %v238 = vpop.f32.mrb[0].mxu0
    %v239 = vadd.f32 %v56, %v238
    %v240 = vpop.f32.mrb[0].mxu0
    %241 = vmatprep.mubr.f32.mxu0 0.0
    %242 = vmatmul.mubr.f32.gmra.mrb[0].mxu0 %v102
    %v243 = vpop.f32.mrb[0].mxu0
    %v244 = vadd.f32 %v56, %v243
    %v245 = vpop.f32.mrb[0].mxu0
    %246 = vmatprep.mubr.f32.mxu0 0.0
    %247 = vmatmul.mubr.f32.gmra.mrb[0].mxu0 %v105
    %v248 = vpop.f32.mrb[0].mxu0
    %v249 = vadd.f32 %v56, %v248
    %v250 = vpop.f32.mrb[0].mxu0
    %251 = vdwg.mxu0
    %vm252 = vcmp.gt.f32.partialorder %v174, 0.0
    %vm253 = vcmp.gt.f32.partialorder %v179, 0.0
    %vm254 = vcmp.gt.f32.partialorder %v184, 0.0
    %vm255 = vcmp.gt.f32.partialorder %v189, 0.0
    %vm256 = vcmp.gt.f32.partialorder %v194, 0.0
    %vm257 = vcmp.gt.f32.partialorder %v199, 0.0
    %vm258 = vcmp.gt.f32.partialorder %v204, 0.0
    %vm259 = vcmp.gt.f32.partialorder %v209, 0.0
    %vm260 = vcmp.gt.f32.partialorder %v214, 0.0
    %vm261 = vcmp.gt.f32.partialorder %v219, 0.0
    %vm262 = vcmp.gt.f32.partialorder %v224, 0.0
    %vm263 = vcmp.gt.f32.partialorder %v229, 0.0
    %vm264 = vcmp.gt.f32.partialorder %v234, 0.0
    %vm265 = vcmp.gt.f32.partialorder %v239, 0.0
    %vm266 = vcmp.gt.f32.partialorder %v244, 0.0
    %vm267 = vcmp.gt.f32.partialorder %v249, 0.0
    %v268 = vmul.f32 %v174, 0.01
    %v269 = vmul.f32 %v179, 0.01
    %v270 = vmul.f32 %v184, 0.01
    %v271 = vmul.f32 %v189, 0.01
    %v272 = vmul.f32 %v194, 0.01
    %v273 = vmul.f32 %v199, 0.01
    %v274 = vmul.f32 %v204, 0.01
    %v275 = vmul.f32 %v209, 0.01
    %v276 = vmul.f32 %v214, 0.01
    %v277 = vmul.f32 %v219, 0.01
    %v278 = vmul.f32 %v224, 0.01
    %v279 = vmul.f32 %v229, 0.01
    %v280 = vmul.f32 %v234, 0.01
    %v281 = vmul.f32 %v239, 0.01
    %v282 = vmul.f32 %v244, 0.01
    %v283 = vmul.f32 %v249, 0.01
    %v284 = vsel %vm252, %v174, %v268
    %v285 = vsel %vm253, %v179, %v269
    %v286 = vsel %vm254, %v184, %v270
    %v287 = vsel %vm255, %v189, %v271
    %v288 = vsel %vm256, %v194, %v272
    %v289 = vsel %vm257, %v199, %v273
    %v290 = vsel %vm258, %v204, %v274
    %v291 = vsel %vm259, %v209, %v275
    %v292 = vsel %vm260, %v214, %v276
    %v293 = vsel %vm261, %v219, %v277
    %v294 = vsel %vm262, %v224, %v278
    %v295 = vsel %vm263, %v229, %v279
    %v296 = vsel %vm264, %v234, %v280
    %v297 = vsel %vm265, %v239, %v281
    %v298 = vsel %vm266, %v244, %v282
    %v299 = vsel %vm267, %v249, %v283
    %v300 = vld [vmem:[%s3] sm:$0xff]
    %v301 = vld [vmem:[%s3 + $0x8] sm:$0xff]
    %v302 = vld [vmem:[%s3 + $0x10] sm:$0xff]
    %v303 = vld [vmem:[%s3 + $0x18] sm:$0xff]
    %v304 = vld [vmem:[%s3 + $0x20] sm:$0xff]
    %v305 = vld [vmem:[%s3 + $0x28] sm:$0xff]
    %v306 = vld [vmem:[%s3 + $0x30] sm:$0xff]
    %v307 = vld [vmem:[%s3 + $0x38] sm:$0xff]
    %v308 = vld [vmem:[%s4] sm:$0x1]
    %v310 = vlaneseq
    %v311 = vshrl.u32 %v310, 7
    %v312 = vsub.s32 0, %v311
    %v313 = vrot.slane %v308, %v312
    %v316 = vsel %vm58, %v284, 0
    %v319 = vsel %vm58, %v285, 0
    %v322 = vsel %vm58, %v286, 0
    %v325 = vsel %vm58, %v287, 0
    %v328 = vsel %vm58, %v288, 0
    %v331 = vsel %vm58, %v289, 0
    %v334 = vsel %vm58, %v290, 0
    %v337 = vsel %vm58, %v291, 0
    %v340 = vsel %vm58, %v292, 0
    %v343 = vsel %vm58, %v293, 0
    %v346 = vsel %vm58, %v294, 0
    %v349 = vsel %vm58, %v295, 0
    %v352 = vsel %vm58, %v296, 0
    %v355 = vsel %vm58, %v297, 0
    %v358 = vsel %vm58, %v298, 0
    %v361 = vsel %vm58, %v299, 0
    %363 = vmatprep.subr.mxu0 0.0
    %364 = vmatpush1.msra.mxu0 %v300
    %365 = vmatprep.subr.mxu0 0.0
    %366 = vmatpush1.msra.mxu0 %v301
    %367 = vmatprep.subr.mxu0 0.0
    %368 = vmatpush1.msra.mxu0 %v302
    %369 = vmatprep.subr.mxu0 0.0
    %370 = vmatpush1.msra.mxu0 %v303
    %371 = vmatprep.subr.mxu0 0.0
    %372 = vmatpush1.msra.mxu0 %v304
    %373 = vmatprep.subr.mxu0 0.0
    %374 = vmatpush1.msra.mxu0 %v305
    %375 = vmatprep.subr.mxu0 0.0
    %376 = vmatpush1.msra.mxu0 %v306
    %377 = vmatprep.subr.mxu0 0.0
    %378 = vmatpush1.msra.mxu0 %v307
    %379 = vmatprep.subr.mxu0 0.0
    %380 = vmatpush1.msra.mxu0 0.0
    %381 = vmatprep.subr.mxu0 0.0
    %382 = vmatpush1.msra.mxu0 0.0
    %383 = vmatprep.subr.mxu0 0.0
    %384 = vmatpush1.msra.mxu0 0.0
    %385 = vmatprep.subr.mxu0 0.0
    %386 = vmatpush1.msra.mxu0 0.0
    %387 = vmatprep.subr.mxu0 0.0
    %388 = vmatpush1.msra.mxu0 0.0
    %389 = vmatprep.subr.mxu0 0.0
    %390 = vmatpush1.msra.mxu0 0.0
    %391 = vmatprep.subr.mxu0 0.0
    %392 = vmatpush1.msra.mxu0 0.0
    %393 = vmatprep.subr.mxu0 0.0
    %394 = vmatpush1.msra.mxu0 0.0
    %395 = vmatprep.subr.mxu0 0.0
    %396 = vmatpush1.msra.mxu0 0.0
    %397 = vmatprep.subr.mxu0 0.0
    %398 = vmatpush1.msra.mxu0 0.0
    %399 = vmatprep.subr.mxu0 0.0
    %400 = vmatpush1.msra.mxu0 0.0
    %401 = vmatprep.subr.mxu0 0.0
    %402 = vmatpush1.msra.mxu0 0.0
    %403 = vmatprep.subr.mxu0 0.0
    %404 = vmatpush1.msra.mxu0 0.0
    %405 = vmatprep.subr.mxu0 0.0
    %406 = vmatpush1.msra.mxu0 0.0
    %407 = vmatprep.subr.mxu0 0.0
    %408 = vmatpush1.msra.mxu0 0.0
    %409 = vmatprep.subr.mxu0 0.0
    %410 = vmatpush1.msra.mxu0 0.0
    %411 = vmatprep.subr.mxu0 0.0
    %412 = vmatpush1.msra.mxu0 0.0
    %413 = vmatprep.subr.mxu0 0.0
    %414 = vmatpush1.msra.mxu0 0.0
    %415 = vmatprep.subr.mxu0 0.0
    %416 = vmatpush1.msra.mxu0 0.0
    %417 = vmatprep.subr.mxu0 0.0
    %418 = vmatpush1.msra.mxu0 0.0
    %419 = vmatprep.subr.mxu0 0.0
    %420 = vmatpush1.msra.mxu0 0.0
    %421 = vmatprep.subr.mxu0 0.0
    %422 = vmatpush1.msra.mxu0 0.0
    %423 = vmatprep.subr.mxu0 0.0
    %424 = vmatpush1.msra.mxu0 0.0
    %425 = vmatprep.subr.mxu0 0.0
    %426 = vmatpush1.msra.mxu0 0.0
    %427 = vmatprep.mubr.f32.mxu0 0.0
    %428 = vmatmul.mubr.f32.gmra.mrb[0].mxu0 %v316
    %v429 = vpop.f32.mrb[0].mxu0
    %v430 = vadd.f32 %v313, %v429
    %v431 = vpop.f32.mrb[0].mxu0
    %432 = vmatprep.mubr.f32.mxu0 0.0
    %433 = vmatmul.mubr.f32.gmra.mrb[0].mxu0 %v319
    %v434 = vpop.f32.mrb[0].mxu0
    %v435 = vadd.f32 %v313, %v434
    %v436 = vpop.f32.mrb[0].mxu0
    %437 = vmatprep.mubr.f32.mxu0 0.0
    %438 = vmatmul.mubr.f32.gmra.mrb[0].mxu0 %v322
    %v439 = vpop.f32.mrb[0].mxu0
    %v440 = vadd.f32 %v313, %v439
    %v441 = vpop.f32.mrb[0].mxu0
    %442 = vmatprep.mubr.f32.mxu0 0.0
    %443 = vmatmul.mubr.f32.gmra.mrb[0].mxu0 %v325
    %v444 = vpop.f32.mrb[0].mxu0
    %v445 = vadd.f32 %v313, %v444
    %v446 = vpop.f32.mrb[0].mxu0
    %447 = vmatprep.mubr.f32.mxu0 0.0
    %448 = vmatmul.mubr.f32.gmra.mrb[0].mxu0 %v328
    %v449 = vpop.f32.mrb[0].mxu0
    %v450 = vadd.f32 %v313, %v449
    %v451 = vpop.f32.mrb[0].mxu0
    %452 = vmatprep.mubr.f32.mxu0 0.0
    %453 = vmatmul.mubr.f32.gmra.mrb[0].mxu0 %v331
    %v454 = vpop.f32.mrb[0].mxu0
    %v455 = vadd.f32 %v313, %v454
    %v456 = vpop.f32.mrb[0].mxu0
    %457 = vmatprep.mubr.f32.mxu0 0.0
    %458 = vmatmul.mubr.f32.gmra.mrb[0].mxu0 %v334
    %v459 = vpop.f32.mrb[0].mxu0
    %v460 = vadd.f32 %v313, %v459
    %v461 = vpop.f32.mrb[0].mxu0
    %462 = vmatprep.mubr.f32.mxu0 0.0
    %463 = vmatmul.mubr.f32.gmra.mrb[0].mxu0 %v337
    %v464 = vpop.f32.mrb[0].mxu0
    %v465 = vadd.f32 %v313, %v464
    %v466 = vpop.f32.mrb[0].mxu0
    %467 = vmatprep.mubr.f32.mxu0 0.0
    %468 = vmatmul.mubr.f32.gmra.mrb[0].mxu0 %v340
    %v469 = vpop.f32.mrb[0].mxu0
    %v470 = vadd.f32 %v313, %v469
    %v471 = vpop.f32.mrb[0].mxu0
    %472 = vmatprep.mubr.f32.mxu0 0.0
    %473 = vmatmul.mubr.f32.gmra.mrb[0].mxu0 %v343
    %v474 = vpop.f32.mrb[0].mxu0
    %v475 = vadd.f32 %v313, %v474
    %v476 = vpop.f32.mrb[0].mxu0
    %477 = vmatprep.mubr.f32.mxu0 0.0
    %478 = vmatmul.mubr.f32.gmra.mrb[0].mxu0 %v346
    %v479 = vpop.f32.mrb[0].mxu0
    %v480 = vadd.f32 %v313, %v479
    %v481 = vpop.f32.mrb[0].mxu0
    %482 = vmatprep.mubr.f32.mxu0 0.0
    %483 = vmatmul.mubr.f32.gmra.mrb[0].mxu0 %v349
    %v484 = vpop.f32.mrb[0].mxu0
    %v485 = vadd.f32 %v313, %v484
    %v486 = vpop.f32.mrb[0].mxu0
    %487 = vmatprep.mubr.f32.mxu0 0.0
    %488 = vmatmul.mubr.f32.gmra.mrb[0].mxu0 %v352
    %v489 = vpop.f32.mrb[0].mxu0
    %v490 = vadd.f32 %v313, %v489
    %v491 = vpop.f32.mrb[0].mxu0
    %492 = vmatprep.mubr.f32.mxu0 0.0
    %493 = vmatmul.mubr.f32.gmra.mrb[0].mxu0 %v355
    %v494 = vpop.f32.mrb[0].mxu0
    %v495 = vadd.f32 %v313, %v494
    %v496 = vpop.f32.mrb[0].mxu0
    %497 = vmatprep.mubr.f32.mxu0 0.0
    %498 = vmatmul.mubr.f32.gmra.mrb[0].mxu0 %v358
    %v499 = vpop.f32.mrb[0].mxu0
    %v500 = vadd.f32 %v313, %v499
    %v501 = vpop.f32.mrb[0].mxu0
    %502 = vmatprep.mubr.f32.mxu0 0.0
    %503 = vmatmul.mubr.f32.gmra.mrb[0].mxu0 %v361
    %v504 = vpop.f32.mrb[0].mxu0
    %v505 = vadd.f32 %v313, %v504
    %v506 = vpop.f32.mrb[0].mxu0
    %507 = vdwg.mxu0
    %vm508 = vcmp.gt.f32.partialorder %v430, 0.0
    %vm509 = vcmp.gt.f32.partialorder %v435, 0.0
    %vm510 = vcmp.gt.f32.partialorder %v440, 0.0
    %vm511 = vcmp.gt.f32.partialorder %v445, 0.0
    %vm512 = vcmp.gt.f32.partialorder %v450, 0.0
    %vm513 = vcmp.gt.f32.partialorder %v455, 0.0
    %vm514 = vcmp.gt.f32.partialorder %v460, 0.0
    %vm515 = vcmp.gt.f32.partialorder %v465, 0.0
    %vm516 = vcmp.gt.f32.partialorder %v470, 0.0
    %vm517 = vcmp.gt.f32.partialorder %v475, 0.0
    %vm518 = vcmp.gt.f32.partialorder %v480, 0.0
    %vm519 = vcmp.gt.f32.partialorder %v485, 0.0
    %vm520 = vcmp.gt.f32.partialorder %v490, 0.0
    %vm521 = vcmp.gt.f32.partialorder %v495, 0.0
    %vm522 = vcmp.gt.f32.partialorder %v500, 0.0
    %vm523 = vcmp.gt.f32.partialorder %v505, 0.0
    %v524 = vmul.f32 %v430, 0.01
    %v525 = vmul.f32 %v435, 0.01
    %v526 = vmul.f32 %v440, 0.01
    %v527 = vmul.f32 %v445, 0.01
    %v528 = vmul.f32 %v450, 0.01
    %v529 = vmul.f32 %v455, 0.01
    %v530 = vmul.f32 %v460, 0.01
    %v531 = vmul.f32 %v465, 0.01
    %v532 = vmul.f32 %v470, 0.01
    %v533 = vmul.f32 %v475, 0.01
    %v534 = vmul.f32 %v480, 0.01
    %v535 = vmul.f32 %v485, 0.01
    %v536 = vmul.f32 %v490, 0.01
    %v537 = vmul.f32 %v495, 0.01
    %v538 = vmul.f32 %v500, 0.01
    %v539 = vmul.f32 %v505, 0.01
    %v540 = vsel %vm508, %v430, %v524
    %v541 = vsel %vm509, %v435, %v525
    %v542 = vsel %vm510, %v440, %v526
    %v543 = vsel %vm511, %v445, %v527
    %v544 = vsel %vm512, %v450, %v528
    %v545 = vsel %vm513, %v455, %v529
    %v546 = vsel %vm514, %v460, %v530
    %v547 = vsel %vm515, %v465, %v531
    %v548 = vsel %vm516, %v470, %v532
    %v549 = vsel %vm517, %v475, %v533
    %v550 = vsel %vm518, %v480, %v534
    %v551 = vsel %vm519, %v485, %v535
    %v552 = vsel %vm520, %v490, %v536
    %v553 = vsel %vm521, %v495, %v537
    %v554 = vsel %vm522, %v500, %v538
    %v555 = vsel %vm523, %v505, %v539
    %v556 = vld [vmem:[%s5] sm:$0xff]
    %v557 = vld [vmem:[%s5 + $0x8] sm:$0xff]
    %v558 = vld [vmem:[%s5 + $0x10] sm:$0xff]
    %v559 = vld [vmem:[%s5 + $0x18] sm:$0xff]
    %v560 = vld [vmem:[%s6] sm:$0x1]
    %v562 = vlaneseq
    %v563 = vshrl.u32 %v562, 7
    %v564 = vsub.s32 0, %v563
    %v565 = vrot.slane %v560, %v564
    %vm567 = vcmask 261120
    %v569 = vsel %vm567, %v540, 0
    %v572 = vsel %vm567, %v541, 0
    %v575 = vsel %vm567, %v542, 0
    %v578 = vsel %vm567, %v543, 0
    %v581 = vsel %vm567, %v544, 0
    %v584 = vsel %vm567, %v545, 0
    %v587 = vsel %vm567, %v546, 0
    %v590 = vsel %vm567, %v547, 0
    %v593 = vsel %vm567, %v548, 0
    %v596 = vsel %vm567, %v549, 0
    %v599 = vsel %vm567, %v550, 0
    %v602 = vsel %vm567, %v551, 0
    %v605 = vsel %vm567, %v552, 0
    %v608 = vsel %vm567, %v553, 0
    %v611 = vsel %vm567, %v554, 0
    %v614 = vsel %vm567, %v555, 0
    %616 = vmatprep.subr.mxu0 0.0
    %617 = vmatpush1.msra.mxu0 %v556
    %618 = vmatprep.subr.mxu0 0.0
    %619 = vmatpush1.msra.mxu0 %v557
    %620 = vmatprep.subr.mxu0 0.0
    %621 = vmatpush1.msra.mxu0 %v558
    %622 = vmatprep.subr.mxu0 0.0
    %623 = vmatpush1.msra.mxu0 %v559
    %624 = vmatprep.subr.mxu0 0.0
    %625 = vmatpush1.msra.mxu0 0.0
    %626 = vmatprep.subr.mxu0 0.0
    %627 = vmatpush1.msra.mxu0 0.0
    %628 = vmatprep.subr.mxu0 0.0
    %629 = vmatpush1.msra.mxu0 0.0
    %630 = vmatprep.subr.mxu0 0.0
    %631 = vmatpush1.msra.mxu0 0.0
    %632 = vmatprep.subr.mxu0 0.0
    %633 = vmatpush1.msra.mxu0 0.0
    %634 = vmatprep.subr.mxu0 0.0
    %635 = vmatpush1.msra.mxu0 0.0
    %636 = vmatprep.subr.mxu0 0.0
    %637 = vmatpush1.msra.mxu0 0.0
    %638 = vmatprep.subr.mxu0 0.0
    %639 = vmatpush1.msra.mxu0 0.0
    %640 = vmatprep.subr.mxu0 0.0
    %641 = vmatpush1.msra.mxu0 0.0
    %642 = vmatprep.subr.mxu0 0.0
    %643 = vmatpush1.msra.mxu0 0.0
    %644 = vmatprep.subr.mxu0 0.0
    %645 = vmatpush1.msra.mxu0 0.0
    %646 = vmatprep.subr.mxu0 0.0
    %647 = vmatpush1.msra.mxu0 0.0
    %648 = vmatprep.subr.mxu0 0.0
    %649 = vmatpush1.msra.mxu0 0.0
    %650 = vmatprep.subr.mxu0 0.0
    %651 = vmatpush1.msra.mxu0 0.0
    %652 = vmatprep.subr.mxu0 0.0
    %653 = vmatpush1.msra.mxu0 0.0
    %654 = vmatprep.subr.mxu0 0.0
    %655 = vmatpush1.msra.mxu0 0.0
    %656 = vmatprep.subr.mxu0 0.0
    %657 = vmatpush1.msra.mxu0 0.0
    %658 = vmatprep.subr.mxu0 0.0
    %659 = vmatpush1.msra.mxu0 0.0
    %660 = vmatprep.subr.mxu0 0.0
    %661 = vmatpush1.msra.mxu0 0.0
    %662 = vmatprep.subr.mxu0 0.0
    %663 = vmatpush1.msra.mxu0 0.0
    %664 = vmatprep.subr.mxu0 0.0
    %665 = vmatpush1.msra.mxu0 0.0
    %666 = vmatprep.subr.mxu0 0.0
    %667 = vmatpush1.msra.mxu0 0.0
    %668 = vmatprep.subr.mxu0 0.0
    %669 = vmatpush1.msra.mxu0 0.0
    %670 = vmatprep.subr.mxu0 0.0
    %671 = vmatpush1.msra.mxu0 0.0
    %672 = vmatprep.subr.mxu0 0.0
    %673 = vmatpush1.msra.mxu0 0.0
    %674 = vmatprep.subr.mxu0 0.0
    %675 = vmatpush1.msra.mxu0 0.0
    %676 = vmatprep.subr.mxu0 0.0
    %677 = vmatpush1.msra.mxu0 0.0
    %678 = vmatprep.subr.mxu0 0.0
    %679 = vmatpush1.msra.mxu0 0.0
    %680 = vmatprep.mubr.f32.mxu0 0.0
    %681 = vmatmul.mubr.f32.gmra.mrb[0].mxu0 %v569
    %v682 = vpop.f32.mrb[0].mxu0
    %v683 = vadd.f32 %v565, %v682
    %v684 = vpop.f32.mrb[0].mxu0
    %685 = vmatprep.mubr.f32.mxu0 0.0
    %686 = vmatmul.mubr.f32.gmra.mrb[0].mxu0 %v572
    %v687 = vpop.f32.mrb[0].mxu0
    %v688 = vadd.f32 %v565, %v687
    %v689 = vpop.f32.mrb[0].mxu0
    %690 = vmatprep.mubr.f32.mxu0 0.0
    %691 = vmatmul.mubr.f32.gmra.mrb[0].mxu0 %v575
    %v692 = vpop.f32.mrb[0].mxu0
    %v693 = vadd.f32 %v565, %v692
    %v694 = vpop.f32.mrb[0].mxu0
    %695 = vmatprep.mubr.f32.mxu0 0.0
    %696 = vmatmul.mubr.f32.gmra.mrb[0].mxu0 %v578
    %v697 = vpop.f32.mrb[0].mxu0
    %v698 = vadd.f32 %v565, %v697
    %v699 = vpop.f32.mrb[0].mxu0
    %700 = vmatprep.mubr.f32.mxu0 0.0
    %701 = vmatmul.mubr.f32.gmra.mrb[0].mxu0 %v581
    %v702 = vpop.f32.mrb[0].mxu0
    %v703 = vadd.f32 %v565, %v702
    %v704 = vpop.f32.mrb[0].mxu0
    %705 = vmatprep.mubr.f32.mxu0 0.0
    %706 = vmatmul.mubr.f32.gmra.mrb[0].mxu0 %v584
    %v707 = vpop.f32.mrb[0].mxu0
    %v708 = vadd.f32 %v565, %v707
    %v709 = vpop.f32.mrb[0].mxu0
    %710 = vmatprep.mubr.f32.mxu0 0.0
    %711 = vmatmul.mubr.f32.gmra.mrb[0].mxu0 %v587
    %v712 = vpop.f32.mrb[0].mxu0
    %v713 = vadd.f32 %v565, %v712
    %v714 = vpop.f32.mrb[0].mxu0
    %715 = vmatprep.mubr.f32.mxu0 0.0
    %716 = vmatmul.mubr.f32.gmra.mrb[0].mxu0 %v590
    %v717 = vpop.f32.mrb[0].mxu0
    %v718 = vadd.f32 %v565, %v717
    %v719 = vpop.f32.mrb[0].mxu0
    %720 = vmatprep.mubr.f32.mxu0 0.0
    %721 = vmatmul.mubr.f32.gmra.mrb[0].mxu0 %v593
    %v722 = vpop.f32.mrb[0].mxu0
    %v723 = vadd.f32 %v565, %v722
    %v724 = vpop.f32.mrb[0].mxu0
    %725 = vmatprep.mubr.f32.mxu0 0.0
    %726 = vmatmul.mubr.f32.gmra.mrb[0].mxu0 %v596
    %v727 = vpop.f32.mrb[0].mxu0
    %v728 = vadd.f32 %v565, %v727
    %v729 = vpop.f32.mrb[0].mxu0
    %730 = vmatprep.mubr.f32.mxu0 0.0
    %731 = vmatmul.mubr.f32.gmra.mrb[0].mxu0 %v599
    %v732 = vpop.f32.mrb[0].mxu0
    %v733 = vadd.f32 %v565, %v732
    %v734 = vpop.f32.mrb[0].mxu0
    %735 = vmatprep.mubr.f32.mxu0 0.0
    %736 = vmatmul.mubr.f32.gmra.mrb[0].mxu0 %v602
    %v737 = vpop.f32.mrb[0].mxu0
    %v738 = vadd.f32 %v565, %v737
    %v739 = vpop.f32.mrb[0].mxu0
    %740 = vmatprep.mubr.f32.mxu0 0.0
    %741 = vmatmul.mubr.f32.gmra.mrb[0].mxu0 %v605
    %v742 = vpop.f32.mrb[0].mxu0
    %v743 = vadd.f32 %v565, %v742
    %v744 = vpop.f32.mrb[0].mxu0
    %745 = vmatprep.mubr.f32.mxu0 0.0
    %746 = vmatmul.mubr.f32.gmra.mrb[0].mxu0 %v608
    %v747 = vpop.f32.mrb[0].mxu0
    %v748 = vadd.f32 %v565, %v747
    %v749 = vpop.f32.mrb[0].mxu0
    %750 = vmatprep.mubr.f32.mxu0 0.0
    %751 = vmatmul.mubr.f32.gmra.mrb[0].mxu0 %v611
    %v752 = vpop.f32.mrb[0].mxu0
    %v753 = vadd.f32 %v565, %v752
    %v754 = vpop.f32.mrb[0].mxu0
    %755 = vmatprep.mubr.f32.mxu0 0.0
    %756 = vmatmul.mubr.f32.gmra.mrb[0].mxu0 %v614
    %v757 = vpop.f32.mrb[0].mxu0
    %v758 = vadd.f32 %v565, %v757
    %v759 = vpop.f32.mrb[0].mxu0
    %760 = vdwg.mxu0
    %761 = vxpose.xlu0.b32.start [1/16] %v683, 128
    %762 = vxpose.xlu0.b32.cont [2/16] %v688, 128
    %763 = vxpose.xlu0.b32.cont [3/16] %v693, 128
    %764 = vxpose.xlu0.b32.cont [4/16] %v698, 128
    %765 = vxpose.xlu0.b32.cont [5/16] %v703, 128
    %766 = vxpose.xlu0.b32.cont [6/16] %v708, 128
    %767 = vxpose.xlu0.b32.cont [7/16] %v713, 128
    %768 = vxpose.xlu0.b32.cont [8/16] %v718, 128
    %769 = vxpose.xlu0.b32.cont [9/16] %v723, 128
    %770 = vxpose.xlu0.b32.cont [10/16] %v728, 128
    %771 = vxpose.xlu0.b32.cont [11/16] %v733, 128
    %772 = vxpose.xlu0.b32.cont [12/16] %v738, 128
    %773 = vxpose.xlu0.b32.cont [13/16] %v743, 128
    %774 = vxpose.xlu0.b32.cont [14/16] %v748, 128
    %775 = vxpose.xlu0.b32.cont [15/16] %v753, 128
    %776 = vxpose.xlu0.b32.end [16/16] %v758, 128
    %v777 = vpop.trf.xlu0
    %v778 = vpop.trf.xlu0
    %v779 = vpop.trf.xlu0
    %v780 = vpop.trf.xlu0
    %v781 = vpop.trf.xlu0
    %v782 = vpop.trf.xlu0
    %v783 = vpop.trf.xlu0
    %v784 = vpop.trf.xlu0
    %v785 = vpop.trf.xlu0
    %v786 = vpop.trf.xlu0
    %v787 = vpop.trf.xlu0
    %v788 = vpop.trf.xlu0
    %v789 = vpop.trf.xlu0
    %v790 = vpop.trf.xlu0
    %v791 = vpop.trf.xlu0
    %v792 = vpop.trf.xlu0
    %v793 = vsub.f32 %v777, %v778
    %v794 = vadd.f32 %v793, 1e-06
    %v795 = vmul.f32 %v794, %v794
    %v796 = vrot.slane %v795, 4
    %v797 = vadd.f32 %v795, %v796
    %v798 = vrot.slane %v797, 2
    %v799 = vadd.f32 %v797, %v798
    %v800 = vrot.slane %v799, 1
    %v801 = vadd.f32 %v799, %v800
    %v802 = vrsqrt.pop %v801
    %v803 = vmul.f32 %v801, %v802
    %vm804 = vcmp.eq.f32.partialorder %v801, inf
    %v805 = vsel %vm804, %v801, %v803
    %vm806 = vcmp.eq.f32.partialorder %v801, 0.0
    %v807 = vand.u32 %v801, 2147483648
    %v808 = vsel %vm806, %v807, %v805
    %809 = vst [vmem:[#allocation2] sm:$0x1] %v808
    // Predicated region
    $region30: #{tpu_custom_call.1} parent=1 // pred_check
      _
    $region31: #{tpu_custom_call.1} parent=1 // pred_check_branch
      %811 = sbr.rel (0) target = $region33
    $region32: #{tpu_custom_call.1} parent=1 // pred_region
      %s813 = ssub.s32 16, 16
      %814 = vsyncadd [#allocation3], %s813
      %s816 = sshll.u32 [#allocation2], 4
      %s817 = int_to_ptr.vmem [resolvable:$true] %s816
      %819 = dma.vmem_to_hbm [thread:$0]  %s817, 16, %s7, [#allocation3]
    $region33: #{tpu_custom_call.1} parent=1 // pred_fallthru
      _
    // Predicated region
    $region34: #{tpu_custom_call.1} parent=1 // pred_check
      _
    $region35: #{tpu_custom_call.1} parent=1 // pred_check_branch
      %821 = sbr.rel (0) target = $region37
    $region36: #{tpu_custom_call.1} parent=1 // pred_region
      %822 = dma.done [#allocation3], 16
    $region37: #{tpu_custom_call.1} parent=1 // pred_fallthru
      _
    %823 = vsyncpa [#allocation3], 1

</llo_original>
